<compile_context>
chip_gen: v7x
topology: tpu7x:2x2x1
jax: 0.10.0
libtpu: 0.0.40
codegen_flags: <defaults>
</compile_context>

<pallas_src>
import functools
import math

import jax
import jax.numpy as jnp
from jax.experimental import pallas as pl
from jax.experimental.pallas import tpu as pltpu

PHI = 1.618033988749895


def _round_up(n: int, m: int) -> int:
    return ((n + m - 1) // m) * m


# --------------------------------------------------------------------------
# Kernel: fused 3-layer MLP (phi folded into weights) + softmax.
# --------------------------------------------------------------------------
def _phi_mlp_kernel(x_ref, w1_ref, b1_ref, w2_ref, b2_ref, wo_ref, bo_ref,
                    o_ref):
    def mm(a, w_ref):
        # Weights are already stored in the MXU input dtype (bf16 or f32);
        # only the activation tile is cast per step.  f32 accumulation.
        return jnp.dot(a.astype(w_ref.dtype), w_ref[...],
                       preferred_element_type=jnp.float32)

    # phi scaling is pre-folded into the weights/biases (prepare_params), so
    # each hidden layer is a plain linear + tanh (EUP) here.
    t = jnp.tanh(mm(x_ref[...], w1_ref) + b1_ref[...])
    t = jnp.tanh(mm(t, w2_ref) + b2_ref[...])
    logits = mm(t, wo_ref) + bo_ref[...]

    # Numerically-stable softmax.  Padded logit lanes have a -1e30 f32 bias so
    # exp()==0 there and the 128-lane normalization equals the true softmax.
    # (The max-subtract could be dropped — logits are bounded since the last
    #  hidden activations are tanh outputs — but it's kept for robustness.)
    m = jnp.max(logits, axis=-1, keepdims=True)
    e = jnp.exp(logits - m)
    denom = jnp.sum(e, axis=-1, keepdims=True)
    o_ref[...] = e * pl.reciprocal(denom, approx=True)   # EUP, not VPU divide


# --------------------------------------------------------------------------
# One-time parameter preparation: phi-fold, pad to lane-dense widths, cast.
# --------------------------------------------------------------------------
def prepare_params(params, *, matmul_dtype=jnp.bfloat16):
    """Fold phi into the weights, pad feature dims to multiples of 128 and
    pre-cast the weight matrices to the MXU input dtype.  Call once and reuse
    the result for every forward call (keeps padding off the steady-state
    critical path)."""
    f32 = jnp.float32
    phi = params["phi_scale"].astype(f32).reshape(1, 1)
    inv_phi = 1.0 / phi

    # phi folding (see module docstring).
    w1 = params["w1"] * inv_phi
    b1 = params["b1"] * inv_phi
    w2 = params["w2"]
    b2 = params["b2"] * inv_phi
    wo = params["wo"] * phi
    bo = params["bo"]

    in_dim, h1 = w1.shape
    h2 = w2.shape[1]
    out_dim = wo.shape[1]
    H1, H2, OUT = (_round_up(d, 128) for d in (h1, h2, out_dim))

    def pad(mat, rows, cols, r, c, fill=0.0, dtype=f32):
        out = jnp.full((rows, cols), fill, f32).at[:r, :c].set(mat.astype(f32))
        return out.astype(dtype)

    return {
        "in_dim": in_dim,
        "out_dim": out_dim,
        # weights pre-cast to the MXU dtype (bf16 by default, all generations)
        "w1": pad(w1, in_dim, H1, in_dim, h1, dtype=matmul_dtype),
        "w2": pad(w2, H1, H2, h1, h2, dtype=matmul_dtype),
        "wo": pad(wo, H2, OUT, h2, out_dim, dtype=matmul_dtype),
        # biases stay f32 (added to the f32-accumulated matmul result).
        "b1": pad(b1, 1, H1, 1, h1),
        "b2": pad(b2, 1, H2, 1, h2),
        # NOTE: the -1e30 padded-logit bias must remain an f32 add after the
        # matmul; do not fold it into a bf16 operand.
        "bo": pad(bo, 1, OUT, 1, out_dim, fill=-1e30),
    }


def _choose_batch_tile(batch: int, batch_tile: int):
    """Pick a sublane-aligned batch tile.  Guarantees >= 2 grid steps whenever
    the padded batch exceeds 8 rows so v7x's two TensorCores both get work."""
    pad8 = _round_up(batch, 8)
    if pad8 <= 8:
        return 8, 8
    half = _round_up((pad8 + 1) // 2, 8)
    tb = max(8, min(_round_up(max(batch_tile, 8), 8), half))
    pad_batch = _round_up(pad8, tb)
    return tb, pad_batch


# --------------------------------------------------------------------------
# Forward wrapper.
# --------------------------------------------------------------------------
def phi_harmonic_network(x, prepared, *, batch_tile=512):
    """PhiHarmonicNetwork forward: x (batch, in_dim) -> softmax probs.

    `prepared` is the output of prepare_params() (phi-folded, padded,
    pre-cast parameters)."""
    batch, in_dim = x.shape
    assert in_dim == prepared["in_dim"]
    out_dim = prepared["out_dim"]
    w1, b1 = prepared["w1"], prepared["b1"]
    w2, b2 = prepared["w2"], prepared["b2"]
    wo, bo = prepared["wo"], prepared["bo"]
    mm_dtype = w1.dtype
    H1, H2, OUT = w1.shape[1], w2.shape[1], wo.shape[1]

    # Batch (sublane) tiling.
    tb, pad_batch = _choose_batch_tile(batch, batch_tile)
    x_in = x.astype(mm_dtype)
    if pad_batch != batch:
        x_in = jnp.zeros((pad_batch, in_dim), mm_dtype).at[:batch, :].set(x_in)
    grid = (pad_batch // tb,)

    flops = 2 * pad_batch * (in_dim * H1 + H1 * H2 + H2 * OUT)
    transcendentals = pad_batch * (H1 + H2 + OUT)
    bytes_accessed = (x_in.size * x_in.dtype.itemsize
                      + pad_batch * OUT * 4
                      + sum(int(a.size) * a.dtype.itemsize
                            for a in (w1, b1, w2, b2, wo, bo)))

    out_padded = pl.pallas_call(
        _phi_mlp_kernel,
        out_shape=jax.ShapeDtypeStruct((pad_batch, OUT), jnp.float32),
        grid=grid,
        in_specs=[
            # activations: one batch tile per grid step (pipelined by Pallas)
            pl.BlockSpec((tb, in_dim), lambda i: (i, 0)),
            # weights / biases: constant index_map -> DMA'd once, VMEM-resident
            pl.BlockSpec((in_dim, H1), lambda i: (0, 0)),
            pl.BlockSpec((1, H1), lambda i: (0, 0)),
            pl.BlockSpec((H1, H2), lambda i: (0, 0)),
            pl.BlockSpec((1, H2), lambda i: (0, 0)),
            pl.BlockSpec((H2, OUT), lambda i: (0, 0)),
            pl.BlockSpec((1, OUT), lambda i: (0, 0)),
        ],
        out_specs=pl.BlockSpec((tb, OUT), lambda i: (i, 0)),
        compiler_params=pltpu.CompilerParams(
            dimension_semantics=("parallel",)),
        cost_estimate=pl.CostEstimate(
            flops=flops,
            transcendentals=transcendentals,
            bytes_accessed=bytes_accessed),
    )(x_in, w1, b1, w2, b2, wo, bo)

    # Strip batch / lane padding outside the kernel (fuses into the consumer
    # under jit; output writeback stays lane-dense inside the kernel).
    return out_padded[:batch, :out_dim]


# --------------------------------------------------------------------------
# Init + pure-JAX reference (true, unpadded, un-folded parameters).
# --------------------------------------------------------------------------
def init_params(key, input_dim, hidden_dims, output_dim):
    """Deterministic init mirroring nn.Linear default (uniform +-1/sqrt(fan_in)).
    Weights stored as (in, out) — transpose of PyTorch's (out, in)."""
    params = {}
    dims = []
    prev = input_dim
    for h in hidden_dims:
        phi_dim = int(h * PHI / 2)
        dims.append((prev, phi_dim))
        prev = phi_dim
    dims.append((prev, output_dim))

    names = ["1", "2", "o"]
    assert len(dims) == len(names), "this script wires exactly 2 hidden layers"

    for (fan_in, fan_out), name in zip(dims, names):
        key, kw, kb = jax.random.split(key, 3)
        bound = 1.0 / math.sqrt(fan_in)
        params[f"w{name}"] = jax.random.uniform(
            kw, (fan_in, fan_out), jnp.float32, -bound, bound)
        params[f"b{name}"] = jax.random.uniform(
            kb, (1, fan_out), jnp.float32, -bound, bound)

    params["phi_scale"] = jnp.full((1, 1), PHI, dtype=jnp.float32)
    return params


def reference_forward(x, params):
    """Pure-JAX reference matching the PyTorch module (no folding/padding)."""
    phi = params["phi_scale"][0, 0]
    h = x @ params["w1"] + params["b1"]
    h = jnp.tanh(h / phi) * phi
    h = h @ params["w2"] + params["b2"]
    h = jnp.tanh(h / phi) * phi
    logits = h @ params["wo"] + params["bo"]
    return jax.nn.softmax(logits, axis=-1)


if __name__ == "__main__":
    # Module config: input_dim=16, hidden_dims=[32, 48], output_dim=8
    #   -> phi dims: int(32*PHI/2)=25, int(48*PHI/2)=38
    input_dim = 16
    hidden_dims = [32, 48]
    output_dim = 8
    batch = 4

    key = jax.random.PRNGKey(0)
    key, kx = jax.random.split(key)
    x = jax.random.normal(kx, (batch, input_dim), dtype=jnp.float32)
    params = init_params(key, input_dim, hidden_dims, output_dim)
    ref = reference_forward(x, params)

    # f32 MXU path (exact math; tolerance covers the approx EUP reciprocal
    # used for the softmax normalization).
    prep_f32 = prepare_params(params, matmul_dtype=jnp.float32)
    out = jax.block_until_ready(phi_harmonic_network(x, prep_f32))
    assert out.shape == (batch, output_dim)
    assert jnp.allclose(out, ref, atol=1e-2, rtol=1e-2), "f32 path mismatch"
    assert jnp.allclose(jnp.sum(out, axis=-1), 1.0, atol=1e-2)

    # Default bf16 MXU-input path (all TPU generations; f32 accumulation).
    prep_bf16 = prepare_params(params)
    out_bf16 = jax.block_until_ready(phi_harmonic_network(x, prep_bf16))
    assert out_bf16.shape == (batch, output_dim)
    assert jnp.allclose(out_bf16, ref, atol=3e-2, rtol=3e-2), "bf16 path mismatch"

    # Multi-step batch grid (resident weights across >= 2 grid steps; also the
    # shape regime where v7x core-sharding applies).
    batch2 = 40
    key, kx2 = jax.random.split(key)
    x2 = jax.random.normal(kx2, (batch2, input_dim), dtype=jnp.float32)
    out2 = jax.block_until_ready(
        phi_harmonic_network(x2, prep_bf16, batch_tile=16))
    assert out2.shape == (batch2, output_dim)
    assert jnp.allclose(out2, reference_forward(x2, params),
                        atol=3e-2, rtol=3e-2), "grid path mismatch"

    print("KERNEL_OK")
</pallas_src>

<mosaic_0001>
module attributes {stable_mosaic.version = 11 : i64} {
  func.func @_phi_mlp_kernel(%arg0: i32, %arg1: memref<8x16xf32, #tpu.memory_space<vmem>>, %arg2: memref<16x128xf32, #tpu.memory_space<vmem>>, %arg3: memref<1x128xf32, #tpu.memory_space<vmem>>, %arg4: memref<128x128xf32, #tpu.memory_space<vmem>>, %arg5: memref<1x128xf32, #tpu.memory_space<vmem>>, %arg6: memref<128x128xf32, #tpu.memory_space<vmem>>, %arg7: memref<1x128xf32, #tpu.memory_space<vmem>>, %arg8: memref<8x128xf32, #tpu.memory_space<vmem>>) attributes {dimension_semantics = [#tpu.dimension_semantics<parallel>], iteration_bounds = array<i64: 1>, scalar_prefetch = 0 : i64, scratch_operands = 0 : i64, tpu.core_type = #tpu.core_type<tc>, window_params = [{transform_indices = @transform_0, window_bounds = array<i64: 8, 16>}, {pipeline_mode = #tpu.pipeline_mode<synchronous>, transform_indices = @transform_1, window_bounds = array<i64: 16, 128>}, {pipeline_mode = #tpu.pipeline_mode<synchronous>, transform_indices = @transform_2, window_bounds = array<i64: 1, 128>}, {pipeline_mode = #tpu.pipeline_mode<synchronous>, transform_indices = @transform_3, window_bounds = array<i64: 128, 128>}, {pipeline_mode = #tpu.pipeline_mode<synchronous>, transform_indices = @transform_4, window_bounds = array<i64: 1, 128>}, {pipeline_mode = #tpu.pipeline_mode<synchronous>, transform_indices = @transform_5, window_bounds = array<i64: 128, 128>}, {pipeline_mode = #tpu.pipeline_mode<synchronous>, transform_indices = @transform_6, window_bounds = array<i64: 1, 128>}, {transform_indices = @transform_7, window_bounds = array<i64: 8, 128>}]} {
    %c0 = arith.constant 0 : index
    %c0_0 = arith.constant 0 : index
    %0 = vector.load %arg1[%c0, %c0_0] : memref<8x16xf32, #tpu.memory_space<vmem>>, vector<8x16xf32>
    %c0_1 = arith.constant 0 : index
    %c0_2 = arith.constant 0 : index
    %1 = vector.load %arg2[%c0_1, %c0_2] : memref<16x128xf32, #tpu.memory_space<vmem>>, vector<16x128xf32>
    %cst = arith.constant dense<0.000000e+00> : vector<8x128xf32>
    %2 = tpu.matmul %0, %1, %cst {dimension_numbers = #tpu.dot_dimension_numbers<[1], [0], [0], [1], [0, 0, 1, 1], [], []>} : vector<8x16xf32>, vector<16x128xf32>, vector<8x128xf32> -> vector<8x128xf32>
    %c0_3 = arith.constant 0 : index
    %c0_4 = arith.constant 0 : index
    %3 = vector.load %arg3[%c0_3, %c0_4] : memref<1x128xf32, #tpu.memory_space<vmem>>, vector<1x128xf32>
    %4 = vector.broadcast %3 : vector<1x128xf32> to vector<8x128xf32>
    %5 = arith.addf %2, %4 : vector<8x128xf32>
    %6 = math.tanh %5 : vector<8x128xf32>
    %c0_5 = arith.constant 0 : index
    %c0_6 = arith.constant 0 : index
    %7 = vector.load %arg4[%c0_5, %c0_6] : memref<128x128xf32, #tpu.memory_space<vmem>>, vector<128x128xf32>
    %cst_7 = arith.constant dense<0.000000e+00> : vector<8x128xf32>
    %8 = tpu.matmul %6, %7, %cst_7 {dimension_numbers = #tpu.dot_dimension_numbers<[1], [0], [0], [1], [0, 0, 1, 1], [], []>} : vector<8x128xf32>, vector<128x128xf32>, vector<8x128xf32> -> vector<8x128xf32>
    %c0_8 = arith.constant 0 : index
    %c0_9 = arith.constant 0 : index
    %9 = vector.load %arg5[%c0_8, %c0_9] : memref<1x128xf32, #tpu.memory_space<vmem>>, vector<1x128xf32>
    %10 = vector.broadcast %9 : vector<1x128xf32> to vector<8x128xf32>
    %11 = arith.addf %8, %10 : vector<8x128xf32>
    %12 = math.tanh %11 : vector<8x128xf32>
    %c0_10 = arith.constant 0 : index
    %c0_11 = arith.constant 0 : index
    %13 = vector.load %arg6[%c0_10, %c0_11] : memref<128x128xf32, #tpu.memory_space<vmem>>, vector<128x128xf32>
    %cst_12 = arith.constant dense<0.000000e+00> : vector<8x128xf32>
    %14 = tpu.matmul %12, %13, %cst_12 {dimension_numbers = #tpu.dot_dimension_numbers<[1], [0], [0], [1], [0, 0, 1, 1], [], []>} : vector<8x128xf32>, vector<128x128xf32>, vector<8x128xf32> -> vector<8x128xf32>
    %c0_13 = arith.constant 0 : index
    %c0_14 = arith.constant 0 : index
    %15 = vector.load %arg7[%c0_13, %c0_14] : memref<1x128xf32, #tpu.memory_space<vmem>>, vector<1x128xf32>
    %16 = vector.broadcast %15 : vector<1x128xf32> to vector<8x128xf32>
    %17 = arith.addf %14, %16 : vector<8x128xf32>
    %cst_15 = arith.constant dense<0xFF800000> : vector<8xf32>
    %18 = vector.multi_reduction <maximumf>, %17, %cst_15 [1] : vector<8x128xf32> to vector<8xf32>
    %19 = vector.shape_cast %18 : vector<8xf32> to vector<8x1xf32>
    %20 = vector.broadcast %19 : vector<8x1xf32> to vector<8x128xf32>
    %21 = arith.subf %17, %20 : vector<8x128xf32>
    %22 = math.exp %21 : vector<8x128xf32>
    %cst_16 = arith.constant dense<0.000000e+00> : vector<8xf32>
    %23 = vector.multi_reduction <add>, %22, %cst_16 [1] : vector<8x128xf32> to vector<8xf32>
    %24 = vector.shape_cast %23 : vector<8xf32> to vector<8x1xf32>
    %25 = tpu.reciprocal %24 {approx = true} : vector<8x1xf32> -> vector<8x1xf32>
    %26 = vector.broadcast %25 : vector<8x1xf32> to vector<8x128xf32>
    %27 = arith.mulf %22, %26 : vector<8x128xf32>
    %c0_17 = arith.constant 0 : index
    %c0_18 = arith.constant 0 : index
    %28 = vector.load %arg8[%c0_17, %c0_18] : memref<8x128xf32, #tpu.memory_space<vmem>>, vector<8x128xf32>
    tpu.vector_store %arg8[%c0_17, %c0_18], %27 {strides = array<i32>} : memref<8x128xf32, #tpu.memory_space<vmem>>, vector<8x128xf32>,
    return
  }
  func.func @transform_0(%arg0: i32) -> (i32, i32) {
    %c0_i32 = arith.constant 0 : i32
    %c0_i32_0 = arith.constant 0 : i32
    return %arg0, %c0_i32 : i32, i32
  }
  func.func @transform_1(%arg0: i32) -> (i32, i32) {
    %c0_i32 = arith.constant 0 : i32
    %c0_i32_0 = arith.constant 0 : i32
    %c0_i32_1 = arith.constant 0 : i32
    return %c0_i32, %c0_i32_0 : i32, i32
  }
  func.func @transform_2(%arg0: i32) -> (i32, i32) {
    %c0_i32 = arith.constant 0 : i32
    %c0_i32_0 = arith.constant 0 : i32
    %c0_i32_1 = arith.constant 0 : i32
    return %c0_i32, %c0_i32_0 : i32, i32
  }
  func.func @transform_3(%arg0: i32) -> (i32, i32) {
    %c0_i32 = arith.constant 0 : i32
    %c0_i32_0 = arith.constant 0 : i32
    %c0_i32_1 = arith.constant 0 : i32
    return %c0_i32, %c0_i32_0 : i32, i32
  }
  func.func @transform_4(%arg0: i32) -> (i32, i32) {
    %c0_i32 = arith.constant 0 : i32
    %c0_i32_0 = arith.constant 0 : i32
    %c0_i32_1 = arith.constant 0 : i32
    return %c0_i32, %c0_i32_0 : i32, i32
  }
  func.func @transform_5(%arg0: i32) -> (i32, i32) {
    %c0_i32 = arith.constant 0 : i32
    %c0_i32_0 = arith.constant 0 : i32
    %c0_i32_1 = arith.constant 0 : i32
    return %c0_i32, %c0_i32_0 : i32, i32
  }
  func.func @transform_6(%arg0: i32) -> (i32, i32) {
    %c0_i32 = arith.constant 0 : i32
    %c0_i32_0 = arith.constant 0 : i32
    %c0_i32_1 = arith.constant 0 : i32
    return %c0_i32, %c0_i32_0 : i32, i32
  }
  func.func @transform_7(%arg0: i32) -> (i32, i32) {
    %c0_i32 = arith.constant 0 : i32
    %c0_i32_0 = arith.constant 0 : i32
    return %arg0, %c0_i32 : i32, i32
  }
}

</mosaic_0001>

<llo_original>
// kernel: tpu_custom_call.1
$region0: #{tpu_custom_call.1}
  #allocation0 [shape = 'u32[]', space=smem, size = 0x4, offset = 0x4, fixed_abs, tag = 'smem constant byte address 0x4 - core index']
  #allocation1 [shape = 'u32[144,128]{1,0:T(1,128)}', space=vmem, size = 0x12000, scoped, tag = 'internal scratch']
  %s0 = inlined_call_operand.hbm [shape: f32[8,16], index: 0, kind: input, shape index: {}]
  %s1 = inlined_call_operand.hbm [shape: f32[16,128], index: 1, kind: input, shape index: {}]
  %s2 = inlined_call_operand.vmem [shape: f32[1,128], index: 2, kind: input, shape index: {}]
  %s3 = inlined_call_operand.hbm [shape: f32[128,128], index: 3, kind: input, shape index: {}]
  %s4 = inlined_call_operand.vmem [shape: f32[1,128], index: 4, kind: input, shape index: {}]
  %s5 = inlined_call_operand.hbm [shape: f32[128,128], index: 5, kind: input, shape index: {}]
  %s6 = inlined_call_operand.vmem [shape: f32[1,128], index: 6, kind: input, shape index: {}]
  %s7 = inlined_call_operand.hbm [shape: f32[8,128], index: 7, kind: output, shape index: {}]
  %s8 = sld [smem:[#allocation0]]
  $region54: #{tpu_custom_call.1} parent=0
    _
  %s10 = ssub.s32 1, %s8
  %s11 = scalar_select 0, %s10, %s8
  $region1: #{tpu_custom_call.1} parent=0
    #allocation2 [shape = 'u8[4096]{0}', space=vmem, size = 0x1000, scoped, tag = 'input window, operand 0, single buffered']
    #allocation3 [shape = 's32[1]{0}', space=sflag, size = 0x4, scoped, tag = 'scoped memory for tpu_custom_call.1']
    #allocation4 [shape = 's32[1]{0}', space=sflag, size = 0x4, scoped, tag = 'scoped memory for tpu_custom_call.1']
    #allocation5 [shape = 'u8[8192]{0}', space=vmem, size = 0x2000, scoped, tag = 'input window, operand 1, single buffered']
    #allocation6 [shape = 's32[1]{0}', space=sflag, size = 0x4, scoped, tag = 'scoped memory for tpu_custom_call.1']
    #allocation7 [shape = 'u8[65536]{0}', space=vmem, size = 0x10000, scoped, tag = 'input window, operand 3, single buffered']
    #allocation8 [shape = 'u8[65536]{0}', space=vmem, size = 0x10000, scoped, tag = 'input window, operand 5, single buffered']
    #allocation9 [shape = 's32[1]{0}', space=sflag, size = 0x4, scoped, tag = 'scoped memory for tpu_custom_call.1']
    #allocation10 [shape = 'u8[4096]{0}', space=vmem, size = 0x1000, scoped, tag = 'output window, operand 0, single buffered']
    %12 = vsyncpa [#allocation3], 0
    %13 = vsyncpa [#allocation6], 0
    %14 = vsyncpa [#allocation9], 0
    %15 = vsyncpa [#allocation4], 0
    // Predicated region
    $region2: #{tpu_custom_call.1} parent=1 // pred_check
      _
    $region3: #{tpu_custom_call.1} parent=1 // pred_check_branch
      %17 = sbr.rel (0) target = $region5
    $region4: #{tpu_custom_call.1} parent=1 // pred_region
      %s19 = ssub.s32 128, 128
      %20 = vsyncadd [#allocation3], %s19
      %s22 = sshll.u32 [#allocation2], 4
      %s23 = int_to_ptr.vmem [resolvable:$true] %s22
      %25 = dma.hbm_to_vmem [thread:$0]  %s0, 128, %s23, [#allocation3]
    $region5: #{tpu_custom_call.1} parent=1 // pred_fallthru
      _
    // Predicated region
    $region6: #{tpu_custom_call.1} parent=1 // pred_check
      _
    $region7: #{tpu_custom_call.1} parent=1 // pred_check_branch
      %27 = sbr.rel (0) target = $region9
    $region8: #{tpu_custom_call.1} parent=1 // pred_region
      %s29 = ssub.s32 256, 256
      %30 = vsyncadd [#allocation6], %s29
      %s31 = sshll.u32 [#allocation5], 4
      %s32 = int_to_ptr.vmem [resolvable:$true] %s31
      %37 = dma.hbm_to_vmem [thread:$0]  %s1, 256, %s32, [#allocation6], 128, 128, 8
    $region9: #{tpu_custom_call.1} parent=1 // pred_fallthru
      _
    // Predicated region
    $region10: #{tpu_custom_call.1} parent=1 // pred_check
      _
    $region11: #{tpu_custom_call.1} parent=1 // pred_check_branch
      %39 = sbr.rel (0) target = $region13
    $region12: #{tpu_custom_call.1} parent=1 // pred_region
      _
    $region13: #{tpu_custom_call.1} parent=1 // pred_fallthru
      _
    // Predicated region
    $region14: #{tpu_custom_call.1} parent=1 // pred_check
      _
    $region15: #{tpu_custom_call.1} parent=1 // pred_check_branch
      %41 = sbr.rel (0) target = $region17
    $region16: #{tpu_custom_call.1} parent=1 // pred_region
      %s43 = ssub.s32 2048, 2048
      %44 = vsyncadd [#allocation6], %s43
      %s45 = sshll.u32 [#allocation7], 4
      %s46 = int_to_ptr.vmem [resolvable:$true] %s45
      %51 = dma.hbm_to_vmem [thread:$0]  %s3, 2048, %s46, [#allocation6], 128, 128, 8
    $region17: #{tpu_custom_call.1} parent=1 // pred_fallthru
      _
    // Predicated region
    $region18: #{tpu_custom_call.1} parent=1 // pred_check
      _
    $region19: #{tpu_custom_call.1} parent=1 // pred_check_branch
      %53 = sbr.rel (0) target = $region21
    $region20: #{tpu_custom_call.1} parent=1 // pred_region
      _
    $region21: #{tpu_custom_call.1} parent=1 // pred_fallthru
      _
    // Predicated region
    $region22: #{tpu_custom_call.1} parent=1 // pred_check
      _
    $region23: #{tpu_custom_call.1} parent=1 // pred_check_branch
      %55 = sbr.rel (0) target = $region25
    $region24: #{tpu_custom_call.1} parent=1 // pred_region
      %s57 = ssub.s32 2048, 2048
      %58 = vsyncadd [#allocation9], %s57
      %s59 = sshll.u32 [#allocation8], 4
      %s60 = int_to_ptr.vmem [resolvable:$true] %s59
      %65 = dma.hbm_to_vmem [thread:$0]  %s5, 2048, %s60, [#allocation9], 128, 128, 8
    $region25: #{tpu_custom_call.1} parent=1 // pred_fallthru
      _
    // Predicated region
    $region26: #{tpu_custom_call.1} parent=1 // pred_check
      _
    $region27: #{tpu_custom_call.1} parent=1 // pred_check_branch
      %67 = sbr.rel (0) target = $region29
    $region28: #{tpu_custom_call.1} parent=1 // pred_region
      _
    $region29: #{tpu_custom_call.1} parent=1 // pred_fallthru
      _
    // Predicated region
    $region30: #{tpu_custom_call.1} parent=1 // pred_check
      _
    $region31: #{tpu_custom_call.1} parent=1 // pred_check_branch
      %69 = sbr.rel (0) target = $region33
    $region32: #{tpu_custom_call.1} parent=1 // pred_region
      %70 = dma.done [#allocation3], 128
    $region33: #{tpu_custom_call.1} parent=1 // pred_fallthru
      _
    // Predicated region
    $region34: #{tpu_custom_call.1} parent=1 // pred_check
      _
    $region35: #{tpu_custom_call.1} parent=1 // pred_check_branch
      %72 = sbr.rel (0) target = $region37
    $region36: #{tpu_custom_call.1} parent=1 // pred_region
      %73 = dma.done [#allocation6], 256
    $region37: #{tpu_custom_call.1} parent=1 // pred_fallthru
      _
    // Predicated region
    $region38: #{tpu_custom_call.1} parent=1 // pred_check
      _
    $region39: #{tpu_custom_call.1} parent=1 // pred_check_branch
      %75 = sbr.rel (0) target = $region41
    $region40: #{tpu_custom_call.1} parent=1 // pred_region
      %76 = dma.done [#allocation6], 2048
    $region41: #{tpu_custom_call.1} parent=1 // pred_fallthru
      _
    // Predicated region
    $region42: #{tpu_custom_call.1} parent=1 // pred_check
      _
    $region43: #{tpu_custom_call.1} parent=1 // pred_check_branch
      %78 = sbr.rel (0) target = $region45
    $region44: #{tpu_custom_call.1} parent=1 // pred_region
      %79 = dma.done [#allocation9], 2048
    $region45: #{tpu_custom_call.1} parent=1 // pred_fallthru
      _
    %v80 = vld [vmem:[#allocation2] sm:$0xff]
    %v81 = vld [vmem:[#allocation5] sm:$0xff]
    %v82 = vld [vmem:[#allocation5 + $0x8] sm:$0xff]
    %v83 = vld [vmem:[%s2] sm:$0x1]
    %v85 = vlaneseq
    %v86 = vshrl.u32 %v85, 7
    %v87 = vsub.s32 0, %v86
    %v88 = vrot.slane %v83, %v87
    %vm90 = vcmask 130048
    %v92 = vsel %vm90, %v80, 0
    %94 = vmatprep.subr.mxu0 0.0
    %95 = vmatpush1.msra.mxu0 %v81
    %96 = vmatprep.subr.mxu0 0.0
    %97 = vmatpush1.msra.mxu0 %v82
    %98 = vmatprep.subr.mxu0 0.0
    %99 = vmatpush1.msra.mxu0 0.0
    %100 = vmatprep.subr.mxu0 0.0
    %101 = vmatpush1.msra.mxu0 0.0
    %102 = vmatprep.subr.mxu0 0.0
    %103 = vmatpush1.msra.mxu0 0.0
    %104 = vmatprep.subr.mxu0 0.0
    %105 = vmatpush1.msra.mxu0 0.0
    %106 = vmatprep.subr.mxu0 0.0
    %107 = vmatpush1.msra.mxu0 0.0
    %108 = vmatprep.subr.mxu0 0.0
    %109 = vmatpush1.msra.mxu0 0.0
    %110 = vmatprep.subr.mxu0 0.0
    %111 = vmatpush1.msra.mxu0 0.0
    %112 = vmatprep.subr.mxu0 0.0
    %113 = vmatpush1.msra.mxu0 0.0
    %114 = vmatprep.subr.mxu0 0.0
    %115 = vmatpush1.msra.mxu0 0.0
    %116 = vmatprep.subr.mxu0 0.0
    %117 = vmatpush1.msra.mxu0 0.0
    %118 = vmatprep.subr.mxu0 0.0
    %119 = vmatpush1.msra.mxu0 0.0
    %120 = vmatprep.subr.mxu0 0.0
    %121 = vmatpush1.msra.mxu0 0.0
    %122 = vmatprep.subr.mxu0 0.0
    %123 = vmatpush1.msra.mxu0 0.0
    %124 = vmatprep.subr.mxu0 0.0
    %125 = vmatpush1.msra.mxu0 0.0
    %126 = vmatprep.subr.mxu0 0.0
    %127 = vmatpush1.msra.mxu0 0.0
    %128 = vmatprep.subr.mxu0 0.0
    %129 = vmatpush1.msra.mxu0 0.0
    %130 = vmatprep.subr.mxu0 0.0
    %131 = vmatpush1.msra.mxu0 0.0
    %132 = vmatprep.subr.mxu0 0.0
    %133 = vmatpush1.msra.mxu0 0.0
    %134 = vmatprep.subr.mxu0 0.0
    %135 = vmatpush1.msra.mxu0 0.0
    %136 = vmatprep.subr.mxu0 0.0
    %137 = vmatpush1.msra.mxu0 0.0
    %138 = vmatprep.subr.mxu0 0.0
    %139 = vmatpush1.msra.mxu0 0.0
    %140 = vmatprep.subr.mxu0 0.0
    %141 = vmatpush1.msra.mxu0 0.0
    %142 = vmatprep.subr.mxu0 0.0
    %143 = vmatpush1.msra.mxu0 0.0
    %144 = vmatprep.subr.mxu0 0.0
    %145 = vmatpush1.msra.mxu0 0.0
    %146 = vmatprep.subr.mxu0 0.0
    %147 = vmatpush1.msra.mxu0 0.0
    %148 = vmatprep.subr.mxu0 0.0
    %149 = vmatpush1.msra.mxu0 0.0
    %150 = vmatprep.subr.mxu0 0.0
    %151 = vmatpush1.msra.mxu0 0.0
    %152 = vmatprep.subr.mxu0 0.0
    %153 = vmatpush1.msra.mxu0 0.0
    %154 = vmatprep.subr.mxu0 0.0
    %155 = vmatpush1.msra.mxu0 0.0
    %156 = vmatprep.subr.mxu0 0.0
    %157 = vmatpush1.msra.mxu0 0.0
    %158 = vmatprep.mubr.f32.mxu0 0.0
    %159 = vmatmul.mubr.f32.gmra.mrb[0].mxu0 %v92
    %v160 = vpop.f32.mrb[0].mxu0
    %v161 = vadd.f32 %v88, %v160
    %v162 = vpop.f32.mrb[0].mxu0
    %163 = vdwg.mxu0
    %v164 = vtanh.pop %v161
    %v165 = vld [vmem:[#allocation7] sm:$0xff]
    %v166 = vld [vmem:[#allocation7 + $0x8] sm:$0xff]
    %v167 = vld [vmem:[#allocation7 + $0x10] sm:$0xff]
    %v168 = vld [vmem:[#allocation7 + $0x18] sm:$0xff]
    %v169 = vld [vmem:[#allocation7 + $0x20] sm:$0xff]
    %v170 = vld [vmem:[#allocation7 + $0x28] sm:$0xff]
    %v171 = vld [vmem:[#allocation7 + $0x30] sm:$0xff]
    %v172 = vld [vmem:[#allocation7 + $0x38] sm:$0xff]
    %v173 = vld [vmem:[#allocation7 + $0x40] sm:$0xff]
    %v174 = vld [vmem:[#allocation7 + $0x48] sm:$0xff]
    %v175 = vld [vmem:[#allocation7 + $0x50] sm:$0xff]
    %v176 = vld [vmem:[#allocation7 + $0x58] sm:$0xff]
    %v177 = vld [vmem:[#allocation7 + $0x60] sm:$0xff]
    %v178 = vld [vmem:[#allocation7 + $0x68] sm:$0xff]
    %v179 = vld [vmem:[#allocation7 + $0x70] sm:$0xff]
    %v180 = vld [vmem:[#allocation7 + $0x78] sm:$0xff]
    %v181 = vld [vmem:[%s4] sm:$0x1]
    %v183 = vlaneseq
    %v184 = vshrl.u32 %v183, 7
    %v185 = vsub.s32 0, %v184
    %v186 = vrot.slane %v181, %v185
    %188 = vmatprep.subr.mxu0 0.0
    %189 = vmatpush1.msra.mxu0 %v165
    %190 = vmatprep.subr.mxu0 0.0
    %191 = vmatpush1.msra.mxu0 %v166
    %192 = vmatprep.subr.mxu0 0.0
    %193 = vmatpush1.msra.mxu0 %v167
    %194 = vmatprep.subr.mxu0 0.0
    %195 = vmatpush1.msra.mxu0 %v168
    %196 = vmatprep.subr.mxu0 0.0
    %197 = vmatpush1.msra.mxu0 %v169
    %198 = vmatprep.subr.mxu0 0.0
    %199 = vmatpush1.msra.mxu0 %v170
    %200 = vmatprep.subr.mxu0 0.0
    %201 = vmatpush1.msra.mxu0 %v171
    %202 = vmatprep.subr.mxu0 0.0
    %203 = vmatpush1.msra.mxu0 %v172
    %204 = vmatprep.subr.mxu0 0.0
    %205 = vmatpush1.msra.mxu0 %v173
    %206 = vmatprep.subr.mxu0 0.0
    %207 = vmatpush1.msra.mxu0 %v174
    %208 = vmatprep.subr.mxu0 0.0
    %209 = vmatpush1.msra.mxu0 %v175
    %210 = vmatprep.subr.mxu0 0.0
    %211 = vmatpush1.msra.mxu0 %v176
    %212 = vmatprep.subr.mxu0 0.0
    %213 = vmatpush1.msra.mxu0 %v177
    %214 = vmatprep.subr.mxu0 0.0
    %215 = vmatpush1.msra.mxu0 %v178
    %216 = vmatprep.subr.mxu0 0.0
    %217 = vmatpush1.msra.mxu0 %v179
    %218 = vmatprep.subr.mxu0 0.0
    %219 = vmatpush1.msra.mxu0 %v180
    %220 = vmatprep.subr.mxu0 0.0
    %221 = vmatpush1.msra.mxu0 0.0
    %222 = vmatprep.subr.mxu0 0.0
    %223 = vmatpush1.msra.mxu0 0.0
    %224 = vmatprep.subr.mxu0 0.0
    %225 = vmatpush1.msra.mxu0 0.0
    %226 = vmatprep.subr.mxu0 0.0
    %227 = vmatpush1.msra.mxu0 0.0
    %228 = vmatprep.subr.mxu0 0.0
    %229 = vmatpush1.msra.mxu0 0.0
    %230 = vmatprep.subr.mxu0 0.0
    %231 = vmatpush1.msra.mxu0 0.0
    %232 = vmatprep.subr.mxu0 0.0
    %233 = vmatpush1.msra.mxu0 0.0
    %234 = vmatprep.subr.mxu0 0.0
    %235 = vmatpush1.msra.mxu0 0.0
    %236 = vmatprep.subr.mxu0 0.0
    %237 = vmatpush1.msra.mxu0 0.0
    %238 = vmatprep.subr.mxu0 0.0
    %239 = vmatpush1.msra.mxu0 0.0
    %240 = vmatprep.subr.mxu0 0.0
    %241 = vmatpush1.msra.mxu0 0.0
    %242 = vmatprep.subr.mxu0 0.0
    %243 = vmatpush1.msra.mxu0 0.0
    %244 = vmatprep.subr.mxu0 0.0
    %245 = vmatpush1.msra.mxu0 0.0
    %246 = vmatprep.subr.mxu0 0.0
    %247 = vmatpush1.msra.mxu0 0.0
    %248 = vmatprep.subr.mxu0 0.0
    %249 = vmatpush1.msra.mxu0 0.0
    %250 = vmatprep.subr.mxu0 0.0
    %251 = vmatpush1.msra.mxu0 0.0
    %252 = vmatprep.mubr.f32.mxu0 0.0
    %253 = vmatmul.mubr.f32.gmra.mrb[0].mxu0 %v164
    %v254 = vpop.f32.mrb[0].mxu0
    %v255 = vadd.f32 %v186, %v254
    %v256 = vpop.f32.mrb[0].mxu0
    %257 = vdwg.mxu0
    %v258 = vtanh.pop %v255
    %v259 = vld [vmem:[#allocation8] sm:$0xff]
    %v260 = vld [vmem:[#allocation8 + $0x8] sm:$0xff]
    %v261 = vld [vmem:[#allocation8 + $0x10] sm:$0xff]
    %v262 = vld [vmem:[#allocation8 + $0x18] sm:$0xff]
    %v263 = vld [vmem:[#allocation8 + $0x20] sm:$0xff]
    %v264 = vld [vmem:[#allocation8 + $0x28] sm:$0xff]
    %v265 = vld [vmem:[#allocation8 + $0x30] sm:$0xff]
    %v266 = vld [vmem:[#allocation8 + $0x38] sm:$0xff]
    %v267 = vld [vmem:[#allocation8 + $0x40] sm:$0xff]
    %v268 = vld [vmem:[#allocation8 + $0x48] sm:$0xff]
    %v269 = vld [vmem:[#allocation8 + $0x50] sm:$0xff]
    %v270 = vld [vmem:[#allocation8 + $0x58] sm:$0xff]
    %v271 = vld [vmem:[#allocation8 + $0x60] sm:$0xff]
    %v272 = vld [vmem:[#allocation8 + $0x68] sm:$0xff]
    %v273 = vld [vmem:[#allocation8 + $0x70] sm:$0xff]
    %v274 = vld [vmem:[#allocation8 + $0x78] sm:$0xff]
    %v275 = vld [vmem:[%s6] sm:$0x1]
    %v277 = vlaneseq
    %v278 = vshrl.u32 %v277, 7
    %v279 = vsub.s32 0, %v278
    %v280 = vrot.slane %v275, %v279
    %282 = vmatprep.subr.mxu0 0.0
    %283 = vmatpush1.msra.mxu0 %v259
    %284 = vmatprep.subr.mxu0 0.0
    %285 = vmatpush1.msra.mxu0 %v260
    %286 = vmatprep.subr.mxu0 0.0
    %287 = vmatpush1.msra.mxu0 %v261
    %288 = vmatprep.subr.mxu0 0.0
    %289 = vmatpush1.msra.mxu0 %v262
    %290 = vmatprep.subr.mxu0 0.0
    %291 = vmatpush1.msra.mxu0 %v263
    %292 = vmatprep.subr.mxu0 0.0
    %293 = vmatpush1.msra.mxu0 %v264
    %294 = vmatprep.subr.mxu0 0.0
    %295 = vmatpush1.msra.mxu0 %v265
    %296 = vmatprep.subr.mxu0 0.0
    %297 = vmatpush1.msra.mxu0 %v266
    %298 = vmatprep.subr.mxu0 0.0
    %299 = vmatpush1.msra.mxu0 %v267
    %300 = vmatprep.subr.mxu0 0.0
    %301 = vmatpush1.msra.mxu0 %v268
    %302 = vmatprep.subr.mxu0 0.0
    %303 = vmatpush1.msra.mxu0 %v269
    %304 = vmatprep.subr.mxu0 0.0
    %305 = vmatpush1.msra.mxu0 %v270
    %306 = vmatprep.subr.mxu0 0.0
    %307 = vmatpush1.msra.mxu0 %v271
    %308 = vmatprep.subr.mxu0 0.0
    %309 = vmatpush1.msra.mxu0 %v272
    %310 = vmatprep.subr.mxu0 0.0
    %311 = vmatpush1.msra.mxu0 %v273
    %312 = vmatprep.subr.mxu0 0.0
    %313 = vmatpush1.msra.mxu0 %v274
    %314 = vmatprep.subr.mxu0 0.0
    %315 = vmatpush1.msra.mxu0 0.0
    %316 = vmatprep.subr.mxu0 0.0
    %317 = vmatpush1.msra.mxu0 0.0
    %318 = vmatprep.subr.mxu0 0.0
    %319 = vmatpush1.msra.mxu0 0.0
    %320 = vmatprep.subr.mxu0 0.0
    %321 = vmatpush1.msra.mxu0 0.0
    %322 = vmatprep.subr.mxu0 0.0
    %323 = vmatpush1.msra.mxu0 0.0
    %324 = vmatprep.subr.mxu0 0.0
    %325 = vmatpush1.msra.mxu0 0.0
    %326 = vmatprep.subr.mxu0 0.0
    %327 = vmatpush1.msra.mxu0 0.0
    %328 = vmatprep.subr.mxu0 0.0
    %329 = vmatpush1.msra.mxu0 0.0
    %330 = vmatprep.subr.mxu0 0.0
    %331 = vmatpush1.msra.mxu0 0.0
    %332 = vmatprep.subr.mxu0 0.0
    %333 = vmatpush1.msra.mxu0 0.0
    %334 = vmatprep.subr.mxu0 0.0
    %335 = vmatpush1.msra.mxu0 0.0
    %336 = vmatprep.subr.mxu0 0.0
    %337 = vmatpush1.msra.mxu0 0.0
    %338 = vmatprep.subr.mxu0 0.0
    %339 = vmatpush1.msra.mxu0 0.0
    %340 = vmatprep.subr.mxu0 0.0
    %341 = vmatpush1.msra.mxu0 0.0
    %342 = vmatprep.subr.mxu0 0.0
    %343 = vmatpush1.msra.mxu0 0.0
    %344 = vmatprep.subr.mxu0 0.0
    %345 = vmatpush1.msra.mxu0 0.0
    %346 = vmatprep.mubr.f32.mxu0 0.0
    %347 = vmatmul.mubr.f32.gmra.mrb[0].mxu0 %v258
    %v348 = vpop.f32.mrb[0].mxu0
    %v349 = vadd.f32 %v280, %v348
    %v350 = vpop.f32.mrb[0].mxu0
    %351 = vdwg.mxu0
    %352 = vmax.xlane.f32.xlu0 %v349
    %v353 = vpop.xlane.xlu0 %352
    %v354 = vsub.f32 %v349, %v353
    %v355 = vmul.f32 %v354, 1.442695
    %v356 = vpow.pop %v355
    %357 = vadd.xlane.f32.xlu0 %v356
    %v358 = vpop.xlane.xlu0 %357
    %v359 = vrcp.pop %v358
    %v360 = vmul.f32 %v356, %v359
    %361 = vst [vmem:[#allocation10] sm:$0xff] %v360
    // Predicated region
    $region46: #{tpu_custom_call.1} parent=1 // pred_check
      _
    $region47: #{tpu_custom_call.1} parent=1 // pred_check_branch
      %363 = sbr.rel (0) target = $region49
    $region48: #{tpu_custom_call.1} parent=1 // pred_region
      %s365 = ssub.s32 128, 128
      %366 = vsyncadd [#allocation4], %s365
      %s368 = sshll.u32 [#allocation10], 4
      %s369 = int_to_ptr.vmem [resolvable:$true] %s368
      %371 = dma.vmem_to_hbm [thread:$0]  %s369, 128, %s7, [#allocation4]
    $region49: #{tpu_custom_call.1} parent=1 // pred_fallthru
      _
    // Predicated region
    $region50: #{tpu_custom_call.1} parent=1 // pred_check
      _
    $region51: #{tpu_custom_call.1} parent=1 // pred_check_branch
      %373 = sbr.rel (0) target = $region53
    $region52: #{tpu_custom_call.1} parent=1 // pred_region
      %374 = dma.done [#allocation4], 128
    $region53: #{tpu_custom_call.1} parent=1 // pred_fallthru
      _
    %375 = vsyncpa [#allocation3], 1
    %376 = vsyncpa [#allocation6], 1
    %377 = vsyncpa [#allocation9], 1
    %378 = vsyncpa [#allocation4], 1

</llo_original>
